<compile_context>
chip_gen: v7x
topology: tpu7x:2x2x1
jax: 0.10.0
libtpu: 0.0.40
codegen_flags: <defaults>
</compile_context>

<pallas_src>
import functools

import jax
import jax.numpy as jnp
from jax.experimental import pallas as pl
from jax.experimental.pallas import tpu as pltpu

LANES = 128                       # lane width of the flattened slab
ROW_TILE = 4096                   # rows per block: 4096 x 128 f32 = 2 MiB/input
MIN_BLOCKS_FOR_2CORES = 8         # only split across 2 TCs when it is worth it
VMEM_LIMIT_BYTES = 32 * 1024 * 1024


def _cdiv(a, b):
    return -(-a // b)


def _num_tensorcores():
    """2 on v7x (two TensorCores per chip), 1 on v5e/v6e/others."""
    try:
        kind = jax.devices()[0].device_kind.lower()
    except Exception:
        return 1
    return 2 if "7" in kind else 1


def _nrmse_partials_kernel(p_ref, t_ref, o_ref, sse_ref, mx_ref, mn_ref, *,
                           blocks_per_core, n_blocks, rows_last, needs_mask,
                           groups):
    c = pl.program_id(0)            # core / partial-output index
    j = pl.program_id(1)            # row-block index within this core's range
    g = c * blocks_per_core + j     # global row-block id

    @pl.when(j == 0)
    def _():
        sse_ref[...] = jnp.zeros_like(sse_ref)
        mx_ref[...] = jnp.full_like(mx_ref, -jnp.inf)
        mn_ref[...] = jnp.full_like(mn_ref, jnp.inf)

    p = p_ref[...].astype(jnp.float32)
    t = t_ref[...].astype(jnp.float32)
    rows = p.shape[0]

    def accumulate(diff, t_for_max, t_for_min):
        # (rows,128) -> (rows//(8G), G, 8, 128) keeps (8,128) tiles intact;
        # the axis-0 reductions are vreg-wise VPU adds/max/min into G
        # independent accumulator groups (no long dependent VALU chain, no
        # per-tile cross-lane XLU reduce).
        k = rows // (8 * groups)
        sse_ref[...] += jnp.sum(
            (diff * diff).reshape(k, groups, 8, LANES), axis=0)
        mx_ref[...] = jnp.maximum(
            mx_ref[...],
            jnp.max(t_for_max.reshape(k, groups, 8, LANES), axis=0))
        mn_ref[...] = jnp.minimum(
            mn_ref[...],
            jnp.min(t_for_min.reshape(k, groups, 8, LANES), axis=0))

    if needs_mask:
        # Fast unmasked path for all but the (single) ragged last block.
        @pl.when(g < n_blocks - 1)
        def _():
            accumulate(p - t, t, t)

        # Row-threshold mask only on the last valid block.  The lane dim is
        # always fully valid because the kernel only sees the 1024-aligned
        # prefix.  Idle clamped steps (g >= n_blocks) skip accumulation.
        @pl.when(g == n_blocks - 1)
        def _():
            row_idx = jax.lax.broadcasted_iota(jnp.int32, p.shape, 0)
            valid = row_idx < rows_last
            accumulate(jnp.where(valid, p - t, 0.0),
                       jnp.where(valid, t, -jnp.inf),
                       jnp.where(valid, t, jnp.inf))
    else:
        @pl.when(g < n_blocks)
        def _():
            accumulate(p - t, t, t)

    @pl.when(j == blocks_per_core - 1)
    def _():
        o_ref[0, 0, :, :] = jnp.sum(sse_ref[...], axis=0)
        o_ref[0, 1, :, :] = jnp.max(mx_ref[...], axis=0)
        o_ref[0, 2, :, :] = jnp.min(mn_ref[...], axis=0)


def nrmse_loss_pallas(pred, target, loss_weight=100.0):
    """NRMSELoss.forward — pred/target any matching shape, e.g. NCHW."""
    assert pred.shape == target.shape
    n = int(pred.size)
    assert n > 0

    # Flatten in the original dtype (f32 cast happens inside the kernel).
    # ravel/reshape of a contiguous tensor is copy-free; no full-tensor pad.
    p_flat = jnp.ravel(pred)
    t_flat = jnp.ravel(target)

    slab = 8 * LANES
    n_main = (n // slab) * slab           # 1024-aligned prefix for the kernel
    tail = n - n_main                     # < 1024 elems -> JAX scalar epilogue

    if n_main > 0:
        rows = n_main // LANES                    # multiple of 8
        rows_per_block = min(ROW_TILE, rows)      # multiple of 8
        n_blocks = _cdiv(rows, rows_per_block)
        rows_last = rows - (n_blocks - 1) * rows_per_block
        needs_mask = rows_last != rows_per_block

        # Independent accumulator groups per statistic (breaks VALU chains).
        groups = 1
        for cand in (8, 4, 2):
            if rows_per_block % (8 * cand) == 0:
                groups = cand
                break

        num_cores = _num_tensorcores()
        if num_cores == 2 and n_blocks < MIN_BLOCKS_FOR_2CORES:
            num_cores = 1                 # not worth splitting / avoid idle DMA
        blocks_per_core = _cdiv(n_blocks, num_cores)

        p2 = (p_flat if n_main == n else p_flat[:n_main]).reshape(rows, LANES)
        t2 = (t_flat if n_main == n else t_flat[:n_main]).reshape(rows, LANES)

        kernel = functools.partial(
            _nrmse_partials_kernel,
            blocks_per_core=blocks_per_core,
            n_blocks=n_blocks,
            rows_last=rows_last,
            needs_mask=needs_mask,
            groups=groups,
        )

        def in_map(c, j):
            # Idle trailing steps (odd n_blocks on the 2-core split) clamp to
            # the block that core just read, so the pipeliner sees an
            # unchanged block index and skips the DMA; the kernel also skips
            # their accumulation (g >= n_blocks).
            return (jnp.minimum(c * blocks_per_core + j, n_blocks - 1), 0)

        bytes_accessed = n_main * (jnp.dtype(pred.dtype).itemsize
                                   + jnp.dtype(target.dtype).itemsize)

        def run(core_semantics):
            return pl.pallas_call(
                kernel,
                out_shape=jax.ShapeDtypeStruct((num_cores, 3, 8, LANES),
                                               jnp.float32),
                grid_spec=pltpu.PrefetchScalarGridSpec(
                    num_scalar_prefetch=0,
                    grid=(num_cores, blocks_per_core),
                    in_specs=[
                        pl.BlockSpec((rows_per_block, LANES), in_map),
                        pl.BlockSpec((rows_per_block, LANES), in_map),
                    ],
                    out_specs=pl.BlockSpec((1, 3, 8, LANES),
                                           lambda c, j: (c, 0, 0, 0)),
                    scratch_shapes=[
                        pltpu.VMEM((groups, 8, LANES), jnp.float32),  # SSE
                        pltpu.VMEM((groups, 8, LANES), jnp.float32),  # max(t)
                        pltpu.VMEM((groups, 8, LANES), jnp.float32),  # min(t)
                    ],
                ),
                compiler_params=pltpu.CompilerParams(
                    dimension_semantics=(core_semantics, pltpu.ARBITRARY),
                    vmem_limit_bytes=VMEM_LIMIT_BYTES,
                ),
                cost_estimate=pl.CostEstimate(
                    flops=5 * n_main, transcendentals=0,
                    bytes_accessed=bytes_accessed),
            )(p2, t2)

        if num_cores == 2:
            # v7x: shard the leading axis across both TensorCores.
            try:
                partials = run(pltpu.CORE_PARALLEL)
            except Exception:  # fall back if CORE_PARALLEL is rejected
                partials = run(pltpu.PARALLEL)
        else:
            partials = run(pltpu.ARBITRARY)

        sse = jnp.sum(partials[:, 0])
        tmax = jnp.max(partials[:, 1])
        tmin = jnp.min(partials[:, 2])
    else:
        # Tensor smaller than one (8,128) slab: the scalar epilogue below
        # handles everything (no kernel launch needed).
        sse = jnp.float32(0.0)
        tmax = jnp.float32(-jnp.inf)
        tmin = jnp.float32(jnp.inf)

    if tail:
        p_tail = p_flat[n_main:].astype(jnp.float32)
        t_tail = t_flat[n_main:].astype(jnp.float32)
        sse = sse + jnp.sum((p_tail - t_tail) ** 2)
        tmax = jnp.maximum(tmax, jnp.max(t_tail))
        tmin = jnp.minimum(tmin, jnp.min(t_tail))

    rmse = jnp.sqrt(sse / jnp.float32(n))
    return jnp.float32(loss_weight) * rmse / (tmax - tmin + jnp.float32(1e-12))


def nrmse_loss_ref(pred, target, loss_weight=100.0):
    pred = pred.astype(jnp.float32)
    target = target.astype(jnp.float32)
    mse = jnp.mean((pred - target) ** 2)
    rmse = jnp.sqrt(mse)
    trange = jnp.max(target) - jnp.min(target)
    return loss_weight * rmse / (trange + 1e-12)


if __name__ == "__main__":
    key = jax.random.PRNGKey(0)
    k1, k2 = jax.random.split(key)
    # layout: NCHW, matching the PyTorch module's conventional inputs.
    pred = jax.random.normal(k1, (2, 4, 16, 16), dtype=jnp.float32)
    target = jax.random.normal(k2, (2, 4, 16, 16), dtype=jnp.float32)

    loss = nrmse_loss_pallas(pred, target, loss_weight=100.0)
    jax.block_until_ready(loss)

    ref = nrmse_loss_ref(pred, target, loss_weight=100.0)
    assert jnp.allclose(loss, ref, rtol=1e-5, atol=1e-5), (loss, ref)

    print("KERNEL_OK")
</pallas_src>

<mosaic_0001>
module attributes {stable_mosaic.version = 11 : i64} {
  func.func @_nrmse_partials_kernel(%arg0: i32, %arg1: i32, %arg2: memref<16x128xf32, #tpu.memory_space<vmem>>, %arg3: memref<16x128xf32, #tpu.memory_space<vmem>>, %arg4: memref<1x3x8x128xf32, #tpu.memory_space<vmem>>, %arg5: memref<2x8x128xf32, #tpu.memory_space<vmem>>, %arg6: memref<2x8x128xf32, #tpu.memory_space<vmem>>, %arg7: memref<2x8x128xf32, #tpu.memory_space<vmem>>) attributes {dimension_semantics = [#tpu.dimension_semantics<arbitrary>, #tpu.dimension_semantics<arbitrary>], iteration_bounds = array<i64: 1, 1>, scalar_prefetch = 0 : i64, scratch_operands = 3 : i64, tpu.core_type = #tpu.core_type<tc>, window_params = [{transform_indices = @transform_0, window_bounds = array<i64: 16, 128>}, {transform_indices = @transform_1, window_bounds = array<i64: 16, 128>}, {transform_indices = @transform_2, window_bounds = array<i64: 1, 3, 8, 128>}]} {
    %c1_i32 = arith.constant 1 : i32
    %0 = arith.muli %arg0, %c1_i32 : i32
    %1 = arith.addi %0, %arg1 : i32
    %c0_i32 = arith.constant 0 : i32
    %2 = arith.cmpi eq, %arg1, %c0_i32 : i32
    %3 = arith.extui %2 : i1 to i32
    %c0_i32_0 = arith.constant 0 : i32
    %4 = arith.cmpi ne, %3, %c0_i32_0 : i32
    scf.if %4 {
      %cst = arith.constant 0.000000e+00 : f32
      %13 = vector.broadcast %cst : f32 to vector<2x8x128xf32>
      %c0_8 = arith.constant 0 : index
      %c0_9 = arith.constant 0 : index
      %c0_10 = arith.constant 0 : index
      %14 = vector.load %arg5[%c0_8, %c0_9, %c0_10] : memref<2x8x128xf32, #tpu.memory_space<vmem>>, vector<2x8x128xf32>
      tpu.vector_store %arg5[%c0_8, %c0_9, %c0_10], %13 {strides = array<i32>} : memref<2x8x128xf32, #tpu.memory_space<vmem>>, vector<2x8x128xf32>,
      %cst_11 = arith.constant 0xFF800000 : f32
      %15 = vector.broadcast %cst_11 : f32 to vector<2x8x128xf32>
      %c0_12 = arith.constant 0 : index
      %c0_13 = arith.constant 0 : index
      %c0_14 = arith.constant 0 : index
      %16 = vector.load %arg6[%c0_12, %c0_13, %c0_14] : memref<2x8x128xf32, #tpu.memory_space<vmem>>, vector<2x8x128xf32>
      tpu.vector_store %arg6[%c0_12, %c0_13, %c0_14], %15 {strides = array<i32>} : memref<2x8x128xf32, #tpu.memory_space<vmem>>, vector<2x8x128xf32>,
      %cst_15 = arith.constant 0x7F800000 : f32
      %17 = vector.broadcast %cst_15 : f32 to vector<2x8x128xf32>
      %c0_16 = arith.constant 0 : index
      %c0_17 = arith.constant 0 : index
      %c0_18 = arith.constant 0 : index
      %18 = vector.load %arg7[%c0_16, %c0_17, %c0_18] : memref<2x8x128xf32, #tpu.memory_space<vmem>>, vector<2x8x128xf32>
      tpu.vector_store %arg7[%c0_16, %c0_17, %c0_18], %17 {strides = array<i32>} : memref<2x8x128xf32, #tpu.memory_space<vmem>>, vector<2x8x128xf32>,
    } else {
    }
    %c0 = arith.constant 0 : index
    %c0_1 = arith.constant 0 : index
    %5 = vector.load %arg2[%c0, %c0_1] : memref<16x128xf32, #tpu.memory_space<vmem>>, vector<16x128xf32>
    %c0_2 = arith.constant 0 : index
    %c0_3 = arith.constant 0 : index
    %6 = vector.load %arg3[%c0_2, %c0_3] : memref<16x128xf32, #tpu.memory_space<vmem>>, vector<16x128xf32>
    %c1_i32_4 = arith.constant 1 : i32
    %7 = arith.cmpi slt, %1, %c1_i32_4 : i32
    %8 = arith.extui %7 : i1 to i32
    %c0_i32_5 = arith.constant 0 : i32
    %9 = arith.cmpi ne, %8, %c0_i32_5 : i32
    scf.if %9 {
      %13 = arith.subf %5, %6 : vector<16x128xf32>
      %c0_8 = arith.constant 0 : index
      %c0_9 = arith.constant 0 : index
      %c0_10 = arith.constant 0 : index
      %14 = vector.load %arg5[%c0_8, %c0_9, %c0_10] : memref<2x8x128xf32, #tpu.memory_space<vmem>>, vector<2x8x128xf32>
      %15 = arith.mulf %13, %13 : vector<16x128xf32>
      %16 = vector.shape_cast %15 : vector<16x128xf32> to vector<1x2x8x128xf32>
      %cst = arith.constant dense<0.000000e+00> : vector<2x8x128xf32>
      %17 = vector.multi_reduction <add>, %16, %cst [0] : vector<1x2x8x128xf32> to vector<2x8x128xf32>
      %18 = arith.addf %14, %17 : vector<2x8x128xf32>
      %c0_11 = arith.constant 0 : index
      %c0_12 = arith.constant 0 : index
      %c0_13 = arith.constant 0 : index
      %19 = vector.load %arg5[%c0_11, %c0_12, %c0_13] : memref<2x8x128xf32, #tpu.memory_space<vmem>>, vector<2x8x128xf32>
      tpu.vector_store %arg5[%c0_11, %c0_12, %c0_13], %18 {strides = array<i32>} : memref<2x8x128xf32, #tpu.memory_space<vmem>>, vector<2x8x128xf32>,
      %c0_14 = arith.constant 0 : index
      %c0_15 = arith.constant 0 : index
      %c0_16 = arith.constant 0 : index
      %20 = vector.load %arg6[%c0_14, %c0_15, %c0_16] : memref<2x8x128xf32, #tpu.memory_space<vmem>>, vector<2x8x128xf32>
      %21 = vector.shape_cast %6 : vector<16x128xf32> to vector<1x2x8x128xf32>
      %cst_17 = arith.constant dense<0xFF800000> : vector<2x8x128xf32>
      %22 = vector.multi_reduction <maximumf>, %21, %cst_17 [0] : vector<1x2x8x128xf32> to vector<2x8x128xf32>
      %23 = arith.maximumf %20, %22 : vector<2x8x128xf32>
      %c0_18 = arith.constant 0 : index
      %c0_19 = arith.constant 0 : index
      %c0_20 = arith.constant 0 : index
      %24 = vector.load %arg6[%c0_18, %c0_19, %c0_20] : memref<2x8x128xf32, #tpu.memory_space<vmem>>, vector<2x8x128xf32>
      tpu.vector_store %arg6[%c0_18, %c0_19, %c0_20], %23 {strides = array<i32>} : memref<2x8x128xf32, #tpu.memory_space<vmem>>, vector<2x8x128xf32>,
      %c0_21 = arith.constant 0 : index
      %c0_22 = arith.constant 0 : index
      %c0_23 = arith.constant 0 : index
      %25 = vector.load %arg7[%c0_21, %c0_22, %c0_23] : memref<2x8x128xf32, #tpu.memory_space<vmem>>, vector<2x8x128xf32>
      %26 = vector.shape_cast %6 : vector<16x128xf32> to vector<1x2x8x128xf32>
      %cst_24 = arith.constant dense<0x7F800000> : vector<2x8x128xf32>
      %27 = vector.multi_reduction <minimumf>, %26, %cst_24 [0] : vector<1x2x8x128xf32> to vector<2x8x128xf32>
      %28 = arith.minimumf %25, %27 : vector<2x8x128xf32>
      %c0_25 = arith.constant 0 : index
      %c0_26 = arith.constant 0 : index
      %c0_27 = arith.constant 0 : index
      %29 = vector.load %arg7[%c0_25, %c0_26, %c0_27] : memref<2x8x128xf32, #tpu.memory_space<vmem>>, vector<2x8x128xf32>
      tpu.vector_store %arg7[%c0_25, %c0_26, %c0_27], %28 {strides = array<i32>} : memref<2x8x128xf32, #tpu.memory_space<vmem>>, vector<2x8x128xf32>,
    } else {
    }
    %c0_i32_6 = arith.constant 0 : i32
    %10 = arith.cmpi eq, %arg1, %c0_i32_6 : i32
    %11 = arith.extui %10 : i1 to i32
    %c0_i32_7 = arith.constant 0 : i32
    %12 = arith.cmpi ne, %11, %c0_i32_7 : i32
    scf.if %12 {
      %c0_8 = arith.constant 0 : index
      %c0_9 = arith.constant 0 : index
      %c0_10 = arith.constant 0 : index
      %13 = vector.load %arg5[%c0_8, %c0_9, %c0_10] : memref<2x8x128xf32, #tpu.memory_space<vmem>>, vector<2x8x128xf32>
      %cst = arith.constant dense<0.000000e+00> : vector<8x128xf32>
      %14 = vector.multi_reduction <add>, %13, %cst [0] : vector<2x8x128xf32> to vector<8x128xf32>
      %c0_11 = arith.constant 0 : index
      %c0_12 = arith.constant 0 : index
      %c0_13 = arith.constant 0 : index
      %c0_14 = arith.constant 0 : index
      %15 = vector.load %arg4[%c0_11, %c0_12, %c0_13, %c0_14] : memref<1x3x8x128xf32, #tpu.memory_space<vmem>>, vector<1x1x8x128xf32>
      %16 = vector.shape_cast %15 : vector<1x1x8x128xf32> to vector<8x128xf32>
      %17 = vector.shape_cast %14 : vector<8x128xf32> to vector<1x1x8x128xf32>
      tpu.vector_store %arg4[%c0_11, %c0_12, %c0_13, %c0_14], %17 {strides = array<i32>} : memref<1x3x8x128xf32, #tpu.memory_space<vmem>>, vector<1x1x8x128xf32>,
      %c0_15 = arith.constant 0 : index
      %c0_16 = arith.constant 0 : index
      %c0_17 = arith.constant 0 : index
      %18 = vector.load %arg6[%c0_15, %c0_16, %c0_17] : memref<2x8x128xf32, #tpu.memory_space<vmem>>, vector<2x8x128xf32>
      %cst_18 = arith.constant dense<0xFF800000> : vector<8x128xf32>
      %19 = vector.multi_reduction <maximumf>, %18, %cst_18 [0] : vector<2x8x128xf32> to vector<8x128xf32>
      %c0_19 = arith.constant 0 : index
      %c1 = arith.constant 1 : index
      %c0_20 = arith.constant 0 : index
      %c0_21 = arith.constant 0 : index
      %20 = vector.load %arg4[%c0_19, %c1, %c0_20, %c0_21] : memref<1x3x8x128xf32, #tpu.memory_space<vmem>>, vector<1x1x8x128xf32>
      %21 = vector.shape_cast %20 : vector<1x1x8x128xf32> to vector<8x128xf32>
      %22 = vector.shape_cast %19 : vector<8x128xf32> to vector<1x1x8x128xf32>
      tpu.vector_store %arg4[%c0_19, %c1, %c0_20, %c0_21], %22 {strides = array<i32>} : memref<1x3x8x128xf32, #tpu.memory_space<vmem>>, vector<1x1x8x128xf32>,
      %c0_22 = arith.constant 0 : index
      %c0_23 = arith.constant 0 : index
      %c0_24 = arith.constant 0 : index
      %23 = vector.load %arg7[%c0_22, %c0_23, %c0_24] : memref<2x8x128xf32, #tpu.memory_space<vmem>>, vector<2x8x128xf32>
      %cst_25 = arith.constant dense<0x7F800000> : vector<8x128xf32>
      %24 = vector.multi_reduction <minimumf>, %23, %cst_25 [0] : vector<2x8x128xf32> to vector<8x128xf32>
      %c0_26 = arith.constant 0 : index
      %c2 = arith.constant 2 : index
      %c0_27 = arith.constant 0 : index
      %c0_28 = arith.constant 0 : index
      %25 = vector.load %arg4[%c0_26, %c2, %c0_27, %c0_28] : memref<1x3x8x128xf32, #tpu.memory_space<vmem>>, vector<1x1x8x128xf32>
      %26 = vector.shape_cast %25 : vector<1x1x8x128xf32> to vector<8x128xf32>
      %27 = vector.shape_cast %24 : vector<8x128xf32> to vector<1x1x8x128xf32>
      tpu.vector_store %arg4[%c0_26, %c2, %c0_27, %c0_28], %27 {strides = array<i32>} : memref<1x3x8x128xf32, #tpu.memory_space<vmem>>, vector<1x1x8x128xf32>,
    } else {
    }
    return
  }
  func.func @transform_0(%arg0: i32, %arg1: i32) -> (i32, i32) {
    %c1_i32 = arith.constant 1 : i32
    %0 = arith.muli %arg0, %c1_i32 : i32
    %1 = arith.addi %0, %arg1 : i32
    %c0_i32 = arith.constant 0 : i32
    %2 = arith.minsi %1, %c0_i32 : i32
    %c0_i32_0 = arith.constant 0 : i32
    %c0_i32_1 = arith.constant 0 : i32
    return %2, %c0_i32_0 : i32, i32
  }
  func.func @transform_1(%arg0: i32, %arg1: i32) -> (i32, i32) {
    %c1_i32 = arith.constant 1 : i32
    %0 = arith.muli %arg0, %c1_i32 : i32
    %1 = arith.addi %0, %arg1 : i32
    %c0_i32 = arith.constant 0 : i32
    %2 = arith.minsi %1, %c0_i32 : i32
    %c0_i32_0 = arith.constant 0 : i32
    %c0_i32_1 = arith.constant 0 : i32
    return %2, %c0_i32_0 : i32, i32
  }
  func.func @transform_2(%arg0: i32, %arg1: i32) -> (i32, i32, i32, i32) {
    %c0_i32 = arith.constant 0 : i32
    %c0_i32_0 = arith.constant 0 : i32
    %c0_i32_1 = arith.constant 0 : i32
    %c0_i32_2 = arith.constant 0 : i32
    return %arg0, %c0_i32, %c0_i32_0, %c0_i32_1 : i32, i32, i32, i32
  }
}

</mosaic_0001>

<llo_original>
// kernel: tpu_custom_call.1
$region0: #{tpu_custom_call.1}
  #allocation0 [shape = 'u32[]', space=smem, size = 0x4, offset = 0x4, fixed_abs, tag = 'smem constant byte address 0x4 - core index']
  #allocation1 [shape = 'u32[144,128]{1,0:T(1,128)}', space=vmem, size = 0x12000, scoped, tag = 'internal scratch']
  #allocation2 [shape = 'f32[2,8,128]{2,1,0:T(8,128)}', space=vmem, size = 0x2000, scoped, tag = 'scratch operand']
  #allocation3 [shape = 'f32[2,8,128]{2,1,0:T(8,128)}', space=vmem, size = 0x2000, scoped, tag = 'scratch operand']
  #allocation4 [shape = 'f32[2,8,128]{2,1,0:T(8,128)}', space=vmem, size = 0x2000, scoped, tag = 'scratch operand']
  %s0 = inlined_call_operand.hbm [shape: f32[16,128], index: 0, kind: input, shape index: {}]
  %s1 = inlined_call_operand.hbm [shape: f32[16,128], index: 1, kind: input, shape index: {}]
  %s2 = inlined_call_operand.hbm [shape: f32[1,3,8,128], index: 2, kind: output, shape index: {}]
  %s3 = sld [smem:[#allocation0]]
  $region38: #{tpu_custom_call.1} parent=0
    _
  %s5 = ssub.s32 1, %s3
  %s6 = scalar_select 0, %s5, %s3
  $region1: #{tpu_custom_call.1} parent=0
    #allocation5 [shape = 'u8[8192]{0}', space=vmem, size = 0x2000, scoped, tag = 'input window, operand 0, single buffered']
    #allocation6 [shape = 's32[1]{0}', space=sflag, size = 0x4, scoped, tag = 'scoped memory for tpu_custom_call.1']
    #allocation7 [shape = 's32[1]{0}', space=sflag, size = 0x4, scoped, tag = 'scoped memory for tpu_custom_call.1']
    #allocation8 [shape = 'u8[8192]{0}', space=vmem, size = 0x2000, scoped, tag = 'input window, operand 1, single buffered']
    #allocation9 [shape = 's32[1]{0}', space=sflag, size = 0x4, scoped, tag = 'scoped memory for tpu_custom_call.1']
    #allocation10 [shape = 'u8[12288]{0}', space=vmem, size = 0x3000, scoped, tag = 'output window, operand 0, single buffered']
    %7 = vsyncpa [#allocation6], 0
    %8 = vsyncpa [#allocation9], 0
    %9 = vsyncpa [#allocation7], 0
    // Predicated region
    $region2: #{tpu_custom_call.1} parent=1 // pred_check
      _
    $region3: #{tpu_custom_call.1} parent=1 // pred_check_branch
      %11 = sbr.rel (0) target = $region5
    $region4: #{tpu_custom_call.1} parent=1 // pred_region
      %s12 = sadd.s32 0, 0
      %p13 = scmp.lt.s32.totalorder %s12, 0
      %s14 = scalar_select %p13, %s12, 0
      %s15 = smul.u32 2, %s14
      %s17 = ssub.s32 256, 256
      %18 = vsyncadd [#allocation6], %s17
      %s19 = smul.addr %s15, 128
      %s20 = scalar_lea.hbm %s0, %s19
      %s21 = sshll.u32 [#allocation5], 4
      %s22 = int_to_ptr.vmem [resolvable:$true] %s21
      %27 = dma.hbm_to_vmem [thread:$0]  %s20, 256, %s22, [#allocation6], 128, 128, 8
    $region5: #{tpu_custom_call.1} parent=1 // pred_fallthru
      _
    // Predicated region
    $region6: #{tpu_custom_call.1} parent=1 // pred_check
      _
    $region7: #{tpu_custom_call.1} parent=1 // pred_check_branch
      %29 = sbr.rel (0) target = $region9
    $region8: #{tpu_custom_call.1} parent=1 // pred_region
      %s30 = sadd.s32 0, 0
      %p31 = scmp.lt.s32.totalorder %s30, 0
      %s32 = scalar_select %p31, %s30, 0
      %s33 = smul.u32 2, %s32
      %s35 = ssub.s32 256, 256
      %36 = vsyncadd [#allocation9], %s35
      %s37 = smul.addr %s33, 128
      %s38 = scalar_lea.hbm %s1, %s37
      %s39 = sshll.u32 [#allocation8], 4
      %s40 = int_to_ptr.vmem [resolvable:$true] %s39
      %45 = dma.hbm_to_vmem [thread:$0]  %s38, 256, %s40, [#allocation9], 128, 128, 8
    $region9: #{tpu_custom_call.1} parent=1 // pred_fallthru
      _
    // Predicated region
    $region10: #{tpu_custom_call.1} parent=1 // pred_check
      _
    $region11: #{tpu_custom_call.1} parent=1 // pred_check_branch
      %47 = sbr.rel (0) target = $region13
    $region12: #{tpu_custom_call.1} parent=1 // pred_region
      %48 = dma.done [#allocation6], 256
    $region13: #{tpu_custom_call.1} parent=1 // pred_fallthru
      _
    // Predicated region
    $region14: #{tpu_custom_call.1} parent=1 // pred_check
      _
    $region15: #{tpu_custom_call.1} parent=1 // pred_check_branch
      %50 = sbr.rel (0) target = $region17
    $region16: #{tpu_custom_call.1} parent=1 // pred_region
      %51 = dma.done [#allocation9], 256
    $region17: #{tpu_custom_call.1} parent=1 // pred_fallthru
      _
    %s52 = sadd.s32 0, 0
    %p53 = scmp.lt.s32.totalorder %s52, 0
    %s54 = scalar_select %p53, %s52, 0
    %s55 = smul.u32 2, %s54
    %s56 = sadd.s32 0, 0
    %p57 = scmp.lt.s32.totalorder %s56, 0
    %s58 = scalar_select %p57, %s56, 0
    %s59 = smul.u32 2, %s58
    %s60 = sadd.s32 0, 0
    %p61 = scmp.eq.s32.totalorder 0, 0
    // Predicated region
    $region18: #{tpu_custom_call.1} parent=1 // pred_check
      %p62 = pneg %p61
    $region19: #{tpu_custom_call.1} parent=1 // pred_check_branch
      %64 = sbr.rel (%p62) target = $region21
    $region20: #{tpu_custom_call.1} parent=1 // pred_region
      %65 = vst [vmem:[#allocation2] sm:$0xff] 0.0
      %66 = vst [vmem:[#allocation2 + $0x8] sm:$0xff] 0.0
      %67 = vst [vmem:[#allocation3] sm:$0xff] -inf
      %68 = vst [vmem:[#allocation3 + $0x8] sm:$0xff] -inf
      %69 = vst [vmem:[#allocation4] sm:$0xff] inf
      %70 = vst [vmem:[#allocation4 + $0x8] sm:$0xff] inf
    $region21: #{tpu_custom_call.1} parent=1 // pred_fallthru
      _
    %v71 = vld [vmem:[#allocation5] sm:$0xff]
    %v72 = vld [vmem:[#allocation5 + $0x8] sm:$0xff]
    %v73 = vld [vmem:[#allocation8] sm:$0xff]
    %v74 = vld [vmem:[#allocation8 + $0x8] sm:$0xff]
    %p75 = scmp.lt.s32.totalorder %s60, 1
    // Predicated region
    $region22: #{tpu_custom_call.1} parent=1 // pred_check
      %p76 = pneg %p75
    $region23: #{tpu_custom_call.1} parent=1 // pred_check_branch
      %78 = sbr.rel (%p76) target = $region25
    $region24: #{tpu_custom_call.1} parent=1 // pred_region
      %v79 = vsub.f32 %v71, %v73
      %v80 = vsub.f32 %v72, %v74
      %v81 = vld [vmem:[#allocation2] sm:$0xff]
      %v82 = vld [vmem:[#allocation2 + $0x8] sm:$0xff]
      %v83 = vmul.f32 %v79, %v79
      %v84 = vmul.f32 %v80, %v80
      %v85 = vadd.f32 %v83, 0.0
      %v86 = vadd.f32 %v84, 0.0
      %v87 = vadd.f32 %v81, %v85
      %v88 = vadd.f32 %v82, %v86
      %89 = vst [vmem:[#allocation2] sm:$0xff] %v87
      %90 = vst [vmem:[#allocation2 + $0x8] sm:$0xff] %v88
      %v91 = vld [vmem:[#allocation3] sm:$0xff]
      %v92 = vld [vmem:[#allocation3 + $0x8] sm:$0xff]
      %v93 = vmax.f32 %v91, %v73
      %v94 = vmax.f32 %v92, %v74
      %95 = vst [vmem:[#allocation3] sm:$0xff] %v93
      %96 = vst [vmem:[#allocation3 + $0x8] sm:$0xff] %v94
      %v97 = vld [vmem:[#allocation4] sm:$0xff]
      %v98 = vld [vmem:[#allocation4 + $0x8] sm:$0xff]
      %v99 = vmin.f32 %v97, %v73
      %v100 = vmin.f32 %v98, %v74
      %101 = vst [vmem:[#allocation4] sm:$0xff] %v99
      %102 = vst [vmem:[#allocation4 + $0x8] sm:$0xff] %v100
    $region25: #{tpu_custom_call.1} parent=1 // pred_fallthru
      _
    // Predicated region
    $region26: #{tpu_custom_call.1} parent=1 // pred_check
      %p103 = pneg %p61
    $region27: #{tpu_custom_call.1} parent=1 // pred_check_branch
      %105 = sbr.rel (%p103) target = $region29
    $region28: #{tpu_custom_call.1} parent=1 // pred_region
      %v106 = vld [vmem:[#allocation2] sm:$0xff]
      %v107 = vld [vmem:[#allocation2 + $0x8] sm:$0xff]
      %v108 = vadd.f32 %v106, %v107
      %109 = vst [vmem:[#allocation10] sm:$0xff] %v108
      %v110 = vld [vmem:[#allocation3] sm:$0xff]
      %v111 = vld [vmem:[#allocation3 + $0x8] sm:$0xff]
      %v112 = vmax.f32 %v110, %v111
      %s113 = scalar_lea.vmem [#allocation10], 8
      %114 = vst [vmem:[%s113] sm:$0xff] %v112
      %v115 = vld [vmem:[#allocation4] sm:$0xff]
      %v116 = vld [vmem:[#allocation4 + $0x8] sm:$0xff]
      %v117 = vmin.f32 %v115, %v116
      %s118 = scalar_lea.vmem [#allocation10], 16
      %119 = vst [vmem:[%s118] sm:$0xff] %v117
    $region29: #{tpu_custom_call.1} parent=1 // pred_fallthru
      _
    // Predicated region
    $region30: #{tpu_custom_call.1} parent=1 // pred_check
      _
    $region31: #{tpu_custom_call.1} parent=1 // pred_check_branch
      %121 = sbr.rel (0) target = $region33
    $region32: #{tpu_custom_call.1} parent=1 // pred_region
      %s123 = ssub.s32 384, 384
      %124 = vsyncadd [#allocation7], %s123
      %s125 = sshll.u32 [#allocation10], 4
      %s126 = int_to_ptr.vmem [resolvable:$true] %s125
      %131 = dma.vmem_to_hbm [thread:$0]  %s126, 384, %s2, [#allocation7], 128, 128, 8
    $region33: #{tpu_custom_call.1} parent=1 // pred_fallthru
      _
    // Predicated region
    $region34: #{tpu_custom_call.1} parent=1 // pred_check
      _
    $region35: #{tpu_custom_call.1} parent=1 // pred_check_branch
      %133 = sbr.rel (0) target = $region37
    $region36: #{tpu_custom_call.1} parent=1 // pred_region
      %134 = dma.done [#allocation7], 384
    $region37: #{tpu_custom_call.1} parent=1 // pred_fallthru
      _
    %135 = vsyncpa [#allocation6], 1
    %136 = vsyncpa [#allocation9], 1
    %137 = vsyncpa [#allocation7], 1

</llo_original>
